<compile_context>
chip_gen: v5e
topology: v5e:2x2
jax: 0.10.0
libtpu: 0.0.40
codegen_flags: <defaults>
</compile_context>

<pallas_src>
import functools

import jax
import jax.numpy as jnp
from jax.experimental import pallas as pl
from jax.experimental.pallas import tpu as pltpu


def _temporal_attention_kernel(x_ref, w_att_ref, b_att_ref, w_fvs_t_ref, b_fvs_ref,
                               att_out_ref, mat_a_ref, fvs_ref,
                               *, seq_len, s_tile, mask_seq):
    # x_ref:       (tb, ts, E)  input dtype (bf16/f32), cast to f32 in-kernel
    # w_att_ref:   (1, E)   f32   FC_ATT weight (row vector)
    # b_att_ref:   (1, 1)   f32   FC_ATT bias
    # w_fvs_t_ref: (ts, F)  f32   FC_FVS weight slice, pre-transposed (rows past
    #                             seq_len are zero-padded on the host side)
    # b_fvs_ref:   (1, F)   f32   FC_FVS bias
    # fvs_ref:     (tb, F)  f32   output block, VMEM-resident across the S sweep
    s_idx = pl.program_id(1)

    x = x_ref[...].astype(jnp.float32)                              # (tb, ts, E)

    # FC_ATT: mat_a[b,s] = sum_e x[b,s,e] * w_att[e] + b_att
    # (lane-axis reduce; the kernel stays HBM-bound, so the otherwise-idle MXU is not
    #  worth the lane-extract/relayout it would take to use here)
    mat_a = jnp.sum(x * w_att_ref[...], axis=-1) + b_att_ref[...]   # (tb, ts)

    # att_out = mat_a * x  (broadcast over embedding dim)
    att_out = mat_a[:, :, None] * x                                 # (tb, ts, E)

    # fvs_pre = mean(att_out, -1) == mat_a * mean(x, -1)  (fused; avoids a second
    # full reduction over the materialized att_out tensor)
    inv_e = jnp.float32(1.0 / x.shape[-1])
    fvs_pre = mat_a * (jnp.sum(x, axis=-1) * inv_e)                 # (tb, ts)

    if mask_seq:
        # Ragged last S tile: rows past the true sequence length must contribute 0
        # to FC_FVS (their w_fvs^T rows are zero-padded too, so 0 * 0 == 0 exactly).
        row = s_idx * s_tile + jax.lax.broadcasted_iota(jnp.int32, fvs_pre.shape, 1)
        fvs_pre = jnp.where(row < seq_len, fvs_pre, 0.0)

    att_out_ref[...] = att_out.astype(att_out_ref.dtype)
    mat_a_ref[...] = mat_a.astype(mat_a_ref.dtype)

    # FC_FVS: accumulate this S-tile's (tb, F) partial straight into the output block,
    # which is VMEM-resident across the S sweep (its index_map is constant over s).
    @pl.when(s_idx == 0)
    def _():
        fvs_ref[...] = jnp.broadcast_to(b_fvs_ref[...], fvs_ref.shape)

    fvs_ref[...] += jnp.dot(fvs_pre, w_fvs_t_ref[...],
                            preferred_element_type=jnp.float32)


def _vmem_limit_bytes():
    """Generation-adaptive VMEM limit: ~100 MiB on v5e/v6e, ~52 MiB on v7x."""
    cap = 64 << 20                       # conservative default (v7x per-TC VMEM)
    try:
        info = pltpu.get_tpu_info()
        cap = int(getattr(info, "vmem_capacity_bytes", cap) or cap)
    except Exception:
        pass
    return max(32 << 20, min(cap - (12 << 20), 100 << 20))


def _pick_b_tile(B):
    """Batch tile: full B if small, else a multiple of 8 (capped) that keeps the
    "parallel" batch grid axis at extent >= 2 so both v7x TensorCores get work."""
    if B <= 8:
        return B
    tb = 8                               # ragged last tile if B % 8 != 0 (writes masked)
    for cand in range(16, 65, 8):
        if B % cand == 0 and B // cand >= 2:
            tb = cand
    return tb


def _per_ts_bytes(tb, E, F, in_bytes, out_bytes):
    # Per unit of ts: double-buffered x input + double-buffered att_out output + ~3 f32
    # in-kernel temporaries on the big (tb, ts, E) blocks, plus the (ts, F) w_fvs^T and
    # (tb, ts) mat_a blocks (both double-buffered).
    return tb * E * (2 * in_bytes + 2 * out_bytes + 12) + 2 * F * 4 + 2 * tb * 4


def _pick_s_tile(S, tb, E, F, in_bytes, out_bytes, budget_bytes):
    """Largest S tile (multiple of 128, or full S) whose real per-step VMEM footprint
    fits the budget."""
    per_ts = _per_ts_bytes(tb, E, F, in_bytes, out_bytes)
    max_ts = max(128, (budget_bytes // per_ts) // 128 * 128)
    if S <= max_ts:
        return S                         # single full-S block (always a legal block)
    ts = max_ts
    if S % ts != 0:
        # Prefer a 128-multiple that divides S (no ragged tile) if one is close enough.
        for cand in range(ts - 128, 127, -128):
            if S % cand == 0 and cand * 2 >= ts:
                ts = cand
                break
    return ts


def temporal_attention_module(video_feature, w_att, b_att, w_fvs, b_fvs,
                              *, b_tile=None, s_tile=None,
                              att_out_dtype=jnp.float32):
    """Pallas forward pass of TemporalAttentionModule.

    Args:
      video_feature: (B, S, E) array, any float dtype (kept native on the wire; cast
                     to f32 inside the kernel like torch's .float()).
      w_att: (1, E)  FC_ATT weight (torch layout: (out=1, in=E)).
      b_att: (1,)    FC_ATT bias.
      w_fvs: (F, S)  FC_FVS weight (torch layout: (out=F, in=S=max_vid_len)).
      b_fvs: (F,)    FC_FVS bias.
      att_out_dtype: dtype of att_out (f32 matches PyTorch; bf16 halves write traffic
                     on this memory-bound kernel if downstream tolerates it).

    Returns:
      att_out: (B, S, E) att_out_dtype
      mat_a:   (B, S)    f32
      f_vs:    (B, F)    f32
    """
    B, S, E = video_feature.shape
    F = w_fvs.shape[0]
    assert w_att.shape == (1, E) and w_fvs.shape == (F, S)

    w_att_row = w_att.reshape(1, E).astype(jnp.float32)
    b_att_2d = b_att.reshape(1, 1).astype(jnp.float32)
    w_fvs_t = jnp.transpose(w_fvs).astype(jnp.float32)              # (S, F)
    b_fvs_2d = b_fvs.reshape(1, F).astype(jnp.float32)

    in_bytes = jnp.dtype(video_feature.dtype).itemsize
    out_bytes = jnp.dtype(att_out_dtype).itemsize
    vmem_limit = _vmem_limit_bytes()
    budget = int(vmem_limit * 0.45)

    tb = b_tile if b_tile is not None else _pick_b_tile(B)
    tb = min(tb, B)
    if b_tile is None and tb > 8 and B > 8:
        # Shrink the batch tile if even a minimal (tb, 128, E) step would not fit.
        if _per_ts_bytes(tb, E, F, in_bytes, out_bytes) * 128 > budget:
            tb = 8

    ts = s_tile if s_tile is not None else _pick_s_tile(S, tb, E, F,
                                                        in_bytes, out_bytes, budget)
    ts = min(ts, S)
    assert tb == B or tb % 8 == 0, "b_tile must equal B or be a multiple of 8"
    assert ts == S or ts % 128 == 0, "s_tile must equal S or be a multiple of 128"

    grid_b = (B + tb - 1) // tb
    grid_s = (S + ts - 1) // ts
    s_pad = grid_s * ts
    mask_seq = s_pad != S
    if mask_seq:
        # Zero-pad FC_FVS weight rows so the ragged last S tile contributes exactly 0.
        w_fvs_t = jnp.pad(w_fvs_t, ((0, s_pad - S), (0, 0)))

    kernel = functools.partial(_temporal_attention_kernel,
                               seq_len=S, s_tile=ts, mask_seq=mask_seq)

    grid_spec = pltpu.PrefetchScalarGridSpec(
        num_scalar_prefetch=0,
        grid=(grid_b, grid_s),
        in_specs=[
            pl.BlockSpec((tb, ts, E), lambda b, s: (b, s, 0)),      # video_feature
            pl.BlockSpec((1, E), lambda b, s: (0, 0)),              # w_att
            pl.BlockSpec((1, 1), lambda b, s: (0, 0)),              # b_att
            pl.BlockSpec((ts, F), lambda b, s: (s, 0)),             # w_fvs^T slice
            pl.BlockSpec((1, F), lambda b, s: (0, 0)),              # b_fvs
        ],
        out_specs=(
            pl.BlockSpec((tb, ts, E), lambda b, s: (b, s, 0)),      # att_out
            pl.BlockSpec((tb, ts), lambda b, s: (b, s)),            # mat_a
            pl.BlockSpec((tb, F), lambda b, s: (b, 0)),             # f_vs (resident over S)
        ),
    )

    out_shapes = (
        jax.ShapeDtypeStruct((B, S, E), att_out_dtype),             # att_out
        jax.ShapeDtypeStruct((B, S), jnp.float32),                  # mat_a
        jax.ShapeDtypeStruct((B, F), jnp.float32),                  # f_vs
    )

    att_out, mat_a, f_vs = pl.pallas_call(
        kernel,
        out_shape=out_shapes,
        grid_spec=grid_spec,
        compiler_params=pltpu.CompilerParams(
            dimension_semantics=("parallel", "arbitrary"),
            vmem_limit_bytes=vmem_limit,
        ),
    )(video_feature, w_att_row, b_att_2d, w_fvs_t, b_fvs_2d)

    return att_out, mat_a, f_vs


def _reference(video_feature, w_att, b_att, w_fvs, b_fvs):
    """Plain-JAX reference mirroring the PyTorch forward exactly."""
    B, S, E = video_feature.shape
    x = video_feature.reshape(-1, E).astype(jnp.float32)            # (B*S, E)
    mat_a = x @ w_att.astype(jnp.float32).T + b_att.astype(jnp.float32)
    att_out = mat_a * x                                             # (B*S, E)
    f_vs = jnp.mean(att_out, axis=-1, keepdims=True).reshape(B, S)
    f_vs = f_vs @ w_fvs.astype(jnp.float32).T + b_fvs.astype(jnp.float32)
    return att_out.reshape(B, S, E), mat_a.reshape(B, S), f_vs


def _run_case(key, B, S, E, F, x_dtype, b_tile=None, s_tile=None,
              atol=1e-5, rtol=1e-5):
    k_x, k_wa, k_ba, k_wf, k_bf = jax.random.split(key, 5)
    video_feature = jax.random.normal(k_x, (B, S, E), dtype=jnp.float32).astype(x_dtype)
    w_att = jax.random.uniform(k_wa, (1, E), minval=-1.0, maxval=1.0) / jnp.sqrt(E)
    b_att = jax.random.uniform(k_ba, (1,), minval=-1.0, maxval=1.0) / jnp.sqrt(E)
    w_fvs = jax.random.uniform(k_wf, (F, S), minval=-1.0, maxval=1.0) / jnp.sqrt(S)
    b_fvs = jax.random.uniform(k_bf, (F,), minval=-1.0, maxval=1.0) / jnp.sqrt(S)

    att_out, mat_a, f_vs = temporal_attention_module(
        video_feature, w_att, b_att, w_fvs, b_fvs, b_tile=b_tile, s_tile=s_tile)
    jax.block_until_ready((att_out, mat_a, f_vs))

    ref_att, ref_mat_a, ref_fvs = _reference(video_feature, w_att, b_att, w_fvs, b_fvs)
    assert att_out.shape == (B, S, E) and mat_a.shape == (B, S) and f_vs.shape == (B, F)
    assert jnp.allclose(att_out, ref_att, atol=atol, rtol=rtol)
    assert jnp.allclose(mat_a, ref_mat_a, atol=atol, rtol=rtol)
    assert jnp.allclose(f_vs, ref_fvs, atol=atol, rtol=rtol)


if __name__ == "__main__":
    key = jax.random.PRNGKey(0)
    k1, k2, k3 = jax.random.split(key, 3)

    # Case 1: module-consistent small shapes (video_embedding_size=32, max_vid_len=8,
    # fvs_dim=16, batch=2); single-tile grid, f32 input.
    _run_case(k1, B=2, S=8, E=32, F=16, x_dtype=jnp.float32)

    # Case 2: auto-tiled pipelined path (bf16 on the wire, batch grid extent 2 for
    # megacore, large auto-sized S tile).
    _run_case(k2, B=16, S=512, E=128, F=32, x_dtype=jnp.bfloat16, atol=2e-4, rtol=2e-4)

    # Case 3: multi-step FC_FVS accumulation across S tiles plus a ragged (masked)
    # last S tile (S=384 with s_tile=256 -> padded to 512).
    _run_case(k3, B=4, S=384, E=256, F=64, x_dtype=jnp.bfloat16, s_tile=256,
              atol=2e-4, rtol=2e-4)

    print("KERNEL_OK")
</pallas_src>

<mosaic_0001>
module attributes {stable_mosaic.version = 11 : i64} {
  func.func @_temporal_attention_kernel(%arg0: i32, %arg1: i32, %arg2: memref<2x8x32xf32, #tpu.memory_space<vmem>>, %arg3: memref<1x32xf32, #tpu.memory_space<vmem>>, %arg4: memref<1x1xf32, #tpu.memory_space<vmem>>, %arg5: memref<8x16xf32, #tpu.memory_space<vmem>>, %arg6: memref<1x16xf32, #tpu.memory_space<vmem>>, %arg7: memref<2x8x32xf32, #tpu.memory_space<vmem>>, %arg8: memref<2x8xf32, #tpu.memory_space<vmem>>, %arg9: memref<2x16xf32, #tpu.memory_space<vmem>>) attributes {dimension_semantics = [#tpu.dimension_semantics<parallel>, #tpu.dimension_semantics<arbitrary>], iteration_bounds = array<i64: 1, 1>, scalar_prefetch = 0 : i64, scratch_operands = 0 : i64, tpu.core_type = #tpu.core_type<tc>, window_params = [{transform_indices = @transform_0, window_bounds = array<i64: 2, 8, 32>}, {pipeline_mode = #tpu.pipeline_mode<synchronous>, transform_indices = @transform_1, window_bounds = array<i64: 1, 32>}, {pipeline_mode = #tpu.pipeline_mode<synchronous>, transform_indices = @transform_2, window_bounds = array<i64: 1, 1>}, {transform_indices = @transform_3, window_bounds = array<i64: 8, 16>}, {pipeline_mode = #tpu.pipeline_mode<synchronous>, transform_indices = @transform_4, window_bounds = array<i64: 1, 16>}, {transform_indices = @transform_5, window_bounds = array<i64: 2, 8, 32>}, {transform_indices = @transform_6, window_bounds = array<i64: 2, 8>}, {transform_indices = @transform_7, window_bounds = array<i64: 2, 16>}]} {
    %c0 = arith.constant 0 : index
    %c0_0 = arith.constant 0 : index
    %c0_1 = arith.constant 0 : index
    %0 = vector.load %arg2[%c0, %c0_0, %c0_1] : memref<2x8x32xf32, #tpu.memory_space<vmem>>, vector<2x8x32xf32>
    %c0_2 = arith.constant 0 : index
    %c0_3 = arith.constant 0 : index
    %1 = vector.load %arg3[%c0_2, %c0_3] : memref<1x32xf32, #tpu.memory_space<vmem>>, vector<1x32xf32>
    %2 = vector.shape_cast %1 : vector<1x32xf32> to vector<1x1x32xf32>
    %3 = vector.broadcast %2 : vector<1x1x32xf32> to vector<2x8x32xf32>
    %4 = arith.mulf %0, %3 : vector<2x8x32xf32>
    %cst = arith.constant dense<0.000000e+00> : vector<2x8xf32>
    %5 = vector.multi_reduction <add>, %4, %cst [2] : vector<2x8x32xf32> to vector<2x8xf32>
    %c0_4 = arith.constant 0 : index
    %c0_5 = arith.constant 0 : index
    %6 = vector.load %arg4[%c0_4, %c0_5] : memref<1x1xf32, #tpu.memory_space<vmem>>, vector<1x1xf32>
    %7 = vector.broadcast %6 : vector<1x1xf32> to vector<2x8xf32>
    %8 = arith.addf %5, %7 : vector<2x8xf32>
    %9 = vector.shape_cast %8 : vector<2x8xf32> to vector<2x8x1xf32>
    %10 = vector.broadcast %9 : vector<2x8x1xf32> to vector<2x8x32xf32>
    %11 = arith.mulf %10, %0 : vector<2x8x32xf32>
    %cst_6 = arith.constant dense<0.000000e+00> : vector<2x8xf32>
    %12 = vector.multi_reduction <add>, %0, %cst_6 [2] : vector<2x8x32xf32> to vector<2x8xf32>
    %cst_7 = arith.constant 3.125000e-02 : f32
    %13 = vector.broadcast %cst_7 : f32 to vector<2x8xf32>
    %14 = arith.mulf %12, %13 : vector<2x8xf32>
    %15 = arith.mulf %8, %14 : vector<2x8xf32>
    %c0_8 = arith.constant 0 : index
    %c0_9 = arith.constant 0 : index
    %c0_10 = arith.constant 0 : index
    %16 = vector.load %arg7[%c0_8, %c0_9, %c0_10] : memref<2x8x32xf32, #tpu.memory_space<vmem>>, vector<2x8x32xf32>
    tpu.vector_store %arg7[%c0_8, %c0_9, %c0_10], %11 {strides = array<i32>} : memref<2x8x32xf32, #tpu.memory_space<vmem>>, vector<2x8x32xf32>,
    %c0_11 = arith.constant 0 : index
    %c0_12 = arith.constant 0 : index
    %17 = vector.load %arg8[%c0_11, %c0_12] : memref<2x8xf32, #tpu.memory_space<vmem>>, vector<2x8xf32>
    tpu.vector_store %arg8[%c0_11, %c0_12], %8 {strides = array<i32>} : memref<2x8xf32, #tpu.memory_space<vmem>>, vector<2x8xf32>,
    %c0_i32 = arith.constant 0 : i32
    %18 = arith.cmpi eq, %arg1, %c0_i32 : i32
    %19 = arith.extui %18 : i1 to i32
    %c0_i32_13 = arith.constant 0 : i32
    %20 = arith.cmpi ne, %19, %c0_i32_13 : i32
    scf.if %20 {
      %c0_21 = arith.constant 0 : index
      %c0_22 = arith.constant 0 : index
      %26 = vector.load %arg6[%c0_21, %c0_22] : memref<1x16xf32, #tpu.memory_space<vmem>>, vector<1x16xf32>
      %27 = vector.shape_cast %26 : vector<1x16xf32> to vector<1x16xf32>
      %28 = vector.broadcast %27 : vector<1x16xf32> to vector<2x16xf32>
      %c0_23 = arith.constant 0 : index
      %c0_24 = arith.constant 0 : index
      %29 = vector.load %arg9[%c0_23, %c0_24] : memref<2x16xf32, #tpu.memory_space<vmem>>, vector<2x16xf32>
      tpu.vector_store %arg9[%c0_23, %c0_24], %28 {strides = array<i32>} : memref<2x16xf32, #tpu.memory_space<vmem>>, vector<2x16xf32>,
    } else {
    }
    %c0_14 = arith.constant 0 : index
    %c0_15 = arith.constant 0 : index
    %21 = vector.load %arg9[%c0_14, %c0_15] : memref<2x16xf32, #tpu.memory_space<vmem>>, vector<2x16xf32>
    %c0_16 = arith.constant 0 : index
    %c0_17 = arith.constant 0 : index
    %22 = vector.load %arg5[%c0_16, %c0_17] : memref<8x16xf32, #tpu.memory_space<vmem>>, vector<8x16xf32>
    %cst_18 = arith.constant dense<0.000000e+00> : vector<2x16xf32>
    %23 = tpu.matmul %15, %22, %cst_18 {dimension_numbers = #tpu.dot_dimension_numbers<[1], [0], [0], [1], [0, 0, 1, 1], [], []>} : vector<2x8xf32>, vector<8x16xf32>, vector<2x16xf32> -> vector<2x16xf32>
    %24 = arith.addf %21, %23 : vector<2x16xf32>
    %c0_19 = arith.constant 0 : index
    %c0_20 = arith.constant 0 : index
    %25 = vector.load %arg9[%c0_19, %c0_20] : memref<2x16xf32, #tpu.memory_space<vmem>>, vector<2x16xf32>
    tpu.vector_store %arg9[%c0_19, %c0_20], %24 {strides = array<i32>} : memref<2x16xf32, #tpu.memory_space<vmem>>, vector<2x16xf32>,
    return
  }
  func.func @transform_0(%arg0: i32, %arg1: i32) -> (i32, i32, i32) {
    %c0_i32 = arith.constant 0 : i32
    %c0_i32_0 = arith.constant 0 : i32
    return %arg0, %arg1, %c0_i32 : i32, i32, i32
  }
  func.func @transform_1(%arg0: i32, %arg1: i32) -> (i32, i32) {
    %c0_i32 = arith.constant 0 : i32
    %c0_i32_0 = arith.constant 0 : i32
    %c0_i32_1 = arith.constant 0 : i32
    return %c0_i32, %c0_i32_0 : i32, i32
  }
  func.func @transform_2(%arg0: i32, %arg1: i32) -> (i32, i32) {
    %c0_i32 = arith.constant 0 : i32
    %c0_i32_0 = arith.constant 0 : i32
    %c0_i32_1 = arith.constant 0 : i32
    return %c0_i32, %c0_i32_0 : i32, i32
  }
  func.func @transform_3(%arg0: i32, %arg1: i32) -> (i32, i32) {
    %c0_i32 = arith.constant 0 : i32
    %c0_i32_0 = arith.constant 0 : i32
    return %arg1, %c0_i32 : i32, i32
  }
  func.func @transform_4(%arg0: i32, %arg1: i32) -> (i32, i32) {
    %c0_i32 = arith.constant 0 : i32
    %c0_i32_0 = arith.constant 0 : i32
    %c0_i32_1 = arith.constant 0 : i32
    return %c0_i32, %c0_i32_0 : i32, i32
  }
  func.func @transform_5(%arg0: i32, %arg1: i32) -> (i32, i32, i32) {
    %c0_i32 = arith.constant 0 : i32
    %c0_i32_0 = arith.constant 0 : i32
    return %arg0, %arg1, %c0_i32 : i32, i32, i32
  }
  func.func @transform_6(%arg0: i32, %arg1: i32) -> (i32, i32) {
    %c0_i32 = arith.constant 0 : i32
    return %arg0, %arg1 : i32, i32
  }
  func.func @transform_7(%arg0: i32, %arg1: i32) -> (i32, i32) {
    %c0_i32 = arith.constant 0 : i32
    %c0_i32_0 = arith.constant 0 : i32
    return %arg0, %c0_i32 : i32, i32
  }
}

</mosaic_0001>

<llo_original>
// kernel: tpu_custom_call.1
$region0: #{tpu_custom_call.1}
  #allocation0 [shape = 'u32[]', space=smem, size = 0x4, offset = 0x4, fixed_abs, tag = 'smem constant byte address 0x4 - core index']
  #allocation1 [shape = 'u32[72,128]{1,0:T(1,128)}', space=vmem, size = 0x9000, scoped, tag = 'internal scratch']
  #allocation2 [shape = 'f32[1,1]{1,0:T(1,128)S(1)}', space=vmem, size = 0x200, scoped, tag = 'scoped memory for tpu_custom_call.1']
  %s0 = inlined_call_operand.hbm [shape: f32[2,8,32], index: 0, kind: input, shape index: {}]
  %s1 = inlined_call_operand.vmem [shape: f32[1,32], index: 1, kind: input, shape index: {}]
  %s2 = inlined_call_operand.<no memory space> [shape: f32[1,1], index: 2, kind: input, shape index: {}]
  %s3 = inlined_call_operand.hbm [shape: f32[8,16], index: 3, kind: input, shape index: {}]
  %s4 = inlined_call_operand.vmem [shape: f32[1,16], index: 4, kind: input, shape index: {}]
  %s5 = inlined_call_operand.hbm [shape: f32[2,8,32], index: 5, kind: output, shape index: {0}]
  %s6 = inlined_call_operand.hbm [shape: f32[2,8], index: 6, kind: output, shape index: {1}]
  %s7 = inlined_call_operand.hbm [shape: f32[2,16], index: 7, kind: output, shape index: {2}]
  %8 = xla_tuple %s5, %s6, %s7
  %s9 = sld [smem:[#allocation0]]
  $region58: #{tpu_custom_call.1} parent=0
    _
  %s11 = ssub.s32 1, %s9
  %s12 = scalar_select 0, %s11, %s9
  %v13 = vstv %s2
  %14 = vst [vmem:[#allocation2] sm:$0x1] %v13
  $region1: #{tpu_custom_call.1} parent=0
    #allocation3 [shape = 'u8[8192]{0}', space=vmem, size = 0x2000, scoped, tag = 'input window, operand 0, single buffered']
    #allocation4 [shape = 's32[1]{0}', space=sflag, size = 0x4, scoped, tag = 'scoped memory for tpu_custom_call.1']
    #allocation5 [shape = 's32[1]{0}', space=sflag, size = 0x4, scoped, tag = 'scoped memory for tpu_custom_call.1']
    #allocation6 [shape = 'u8[4096]{0}', space=vmem, size = 0x1000, scoped, tag = 'input window, operand 3, single buffered']
    #allocation7 [shape = 's32[1]{0}', space=sflag, size = 0x4, scoped, tag = 'scoped memory for tpu_custom_call.1']
    #allocation8 [shape = 'u8[8192]{0}', space=vmem, size = 0x2000, scoped, tag = 'output window, operand 0, single buffered']
    #allocation9 [shape = 'u8[1024]{0}', space=vmem, size = 0x400, scoped, tag = 'output window, operand 1, single buffered']
    #allocation10 [shape = 's32[1]{0}', space=sflag, size = 0x4, scoped, tag = 'scoped memory for tpu_custom_call.1']
    #allocation11 [shape = 'u8[1024]{0}', space=vmem, size = 0x400, scoped, tag = 'output window, operand 2, single buffered']
    %15 = vsyncpa [#allocation4], 0
    %16 = vsyncpa [#allocation7], 0
    %17 = vsyncpa [#allocation5], 0
    %18 = vsyncpa [#allocation10], 0
    // Predicated region
    $region2: #{tpu_custom_call.1} parent=1 // pred_check
      _
    $region3: #{tpu_custom_call.1} parent=1 // pred_check_branch
      %20 = sbr.rel (0) target = $region5
    $region4: #{tpu_custom_call.1} parent=1 // pred_region
      %22 = vsyncadd [#allocation4], 0
      %s23 = sshll.u32 %s0, 4
      %s24 = int_to_ptr.hbm [resolvable:$true] %s23
      %s25 = sshll.u32 [#allocation3], 4
      %s26 = int_to_ptr.vmem [resolvable:$true] %s25
      %31 = dma.hbm_to_vmem [thread:$0]  %s24, 256, %s26, [#allocation4], 128, 128, 8
    $region5: #{tpu_custom_call.1} parent=1 // pred_fallthru
      _
    // Predicated region
    $region6: #{tpu_custom_call.1} parent=1 // pred_check
      _
    $region7: #{tpu_custom_call.1} parent=1 // pred_check_branch
      %33 = sbr.rel (0) target = $region9
    $region8: #{tpu_custom_call.1} parent=1 // pred_region
      _
    $region9: #{tpu_custom_call.1} parent=1 // pred_fallthru
      _
    // Predicated region
    $region10: #{tpu_custom_call.1} parent=1 // pred_check
      _
    $region11: #{tpu_custom_call.1} parent=1 // pred_check_branch
      %35 = sbr.rel (0) target = $region13
    $region12: #{tpu_custom_call.1} parent=1 // pred_region
      _
    $region13: #{tpu_custom_call.1} parent=1 // pred_fallthru
      _
    // Predicated region
    $region14: #{tpu_custom_call.1} parent=1 // pred_check
      _
    $region15: #{tpu_custom_call.1} parent=1 // pred_check_branch
      %37 = sbr.rel (0) target = $region17
    $region16: #{tpu_custom_call.1} parent=1 // pred_region
      %39 = vsyncadd [#allocation7], 0
      %s41 = sshll.u32 %s3, 4
      %s42 = int_to_ptr.hbm [resolvable:$true] %s41
      %s43 = sshll.u32 [#allocation6], 4
      %s44 = int_to_ptr.vmem [resolvable:$true] %s43
      %46 = dma.hbm_to_vmem [thread:$0]  %s42, 128, %s44, [#allocation7]
    $region17: #{tpu_custom_call.1} parent=1 // pred_fallthru
      _
    // Predicated region
    $region18: #{tpu_custom_call.1} parent=1 // pred_check
      _
    $region19: #{tpu_custom_call.1} parent=1 // pred_check_branch
      %48 = sbr.rel (0) target = $region21
    $region20: #{tpu_custom_call.1} parent=1 // pred_region
      _
    $region21: #{tpu_custom_call.1} parent=1 // pred_fallthru
      _
    // Predicated region
    $region22: #{tpu_custom_call.1} parent=1 // pred_check
      _
    $region23: #{tpu_custom_call.1} parent=1 // pred_check_branch
      %50 = sbr.rel (0) target = $region25
    $region24: #{tpu_custom_call.1} parent=1 // pred_region
      %52 = dma.done [#allocation4], 256
    $region25: #{tpu_custom_call.1} parent=1 // pred_fallthru
      _
    // Predicated region
    $region26: #{tpu_custom_call.1} parent=1 // pred_check
      _
    $region27: #{tpu_custom_call.1} parent=1 // pred_check_branch
      %54 = sbr.rel (0) target = $region29
    $region28: #{tpu_custom_call.1} parent=1 // pred_region
      %56 = dma.done [#allocation7], 128
    $region29: #{tpu_custom_call.1} parent=1 // pred_fallthru
      _
    %v57 = vld [vmem:[#allocation3] sm:$0xff]
    %v58 = vld [vmem:[#allocation3 + $0x8] sm:$0xff]
    %v59 = vld [vmem:[%s1] sm:$0x1]
    %v61 = vperm.slane %v59, 0
    %v63 = vmul.f32 %v57, %v61
    %v64 = vmul.f32 %v58, %v61
    %vm65 = vcmask 261120
    %v66 = vsel %vm65, %v63, 0.0
    %67 = vadd.xlane.f32.xlu0 %v66
    %v68 = vpop.xlane.xlu0 %67
    %v69 = vsel %vm65, %v64, 0.0
    %70 = vadd.xlane.f32.xlu0 %v69
    %v71 = vpop.xlane.xlu0 %70
    %v72 = vld [vmem:[#allocation2] sm:$0x1]
    %v74 = vperm.slane %v72, 0
    %75 = vset.pattern.permute.xlu0 0
    %76 = vperm.xlu0 %75, %v74
    %v77 = vpop.permute.xlu0 %76
    %v79 = vadd.f32 %v68, %v77
    %v80 = vadd.f32 %v71, %v77
    %v81 = vmul.f32 %v79, %v57
    %v82 = vmul.f32 %v80, %v58
    %v83 = vsel %vm65, %v57, 0.0
    %84 = vadd.xlane.f32.xlu0 %v83
    %v85 = vpop.xlane.xlu0 %84
    %v86 = vsel %vm65, %v58, 0.0
    %87 = vadd.xlane.f32.xlu0 %v86
    %v88 = vpop.xlane.xlu0 %87
    %v89 = vmul.f32 %v85, 0.03125
    %v90 = vmul.f32 %v88, 0.03125
    %v91 = vmul.f32 %v79, %v89
    %v92 = vmul.f32 %v80, %v90
    %93 = vst.msk [vmem:[#allocation8] sm:$0xff] %vm65, %v81
    %94 = vst.msk [vmem:[#allocation8 + $0x8] sm:$0xff] %vm65, %v82
    %v97 = vlaneseq
    %v98 = vand.u32 %v97, 127
    %v99 = vperm.slane %v79, %v98
    %v100 = vperm.slane %v80, %v98
    %vm101 = vcmask 1041409
    %v102 = vsel %vm101, %v100, %v99
    %vm104 = vcmask 58368
    %105 = vst.msk [vmem:[#allocation9] sm:$0x3] %vm104, %v102
    %p106 = scmp.eq.s32.totalorder 0, 0
    // Predicated region
    $region30: #{tpu_custom_call.1} parent=1 // pred_check
      %p107 = pneg %p106
    $region31: #{tpu_custom_call.1} parent=1 // pred_check_branch
      %109 = sbr.rel (%p107) target = $region33
    $region32: #{tpu_custom_call.1} parent=1 // pred_region
      %v110 = vld [vmem:[%s4] sm:$0x1]
      %v112 = vperm.slane %v110, 0
      %vm114 = vcmask 123904
      %115 = vst.msk [vmem:[#allocation11] sm:$0x3] %vm114, %v112
    $region33: #{tpu_custom_call.1} parent=1 // pred_fallthru
      _
    %v116 = vld [vmem:[#allocation11] sm:$0x3]
    %v117 = vld [vmem:[#allocation6] sm:$0xff]
    %v120 = vperm.slane %v91, %v98
    %v121 = vperm.slane %v92, %v98
    %v122 = vsel %vm101, %v121, %v120
    %vm123 = vcmask 64512
    %v124 = vsel %vm123, %v122, 0
    %126 = vmatpush.msra.mxu0 0.0
    %127 = vmatpush.msra.mxu0 0.0
    %128 = vmatpush.msra.mxu0 0.0
    %129 = vmatpush.msra.mxu0 0.0
    %130 = vmatpush.msra.mxu0 0.0
    %131 = vmatpush.msra.mxu0 0.0
    %132 = vmatpush.msra.mxu0 0.0
    %133 = vmatpush.msra.mxu0 0.0
    %134 = vmatpush.msra.mxu0 0.0
    %135 = vmatpush.msra.mxu0 0.0
    %136 = vmatpush.msra.mxu0 0.0
    %137 = vmatpush.msra.mxu0 0.0
    %138 = vmatpush.msra.mxu0 0.0
    %139 = vmatpush.msra.mxu0 0.0
    %140 = vmatpush.msra.mxu0 0.0
    %141 = vmatpush.msra.mxu0 %v117
    %142 = vmatmul.f32.gmra.mxu0 %v124
    %v143 = vpop.f32.mrf.mxu0
    %v144 = vadd.f32 0.0, %v143
    %145 = vdwg.mxu0
    %v146 = vadd.f32 %v116, %v144
    %vm147 = vcmask 123904
    %148 = vst.msk [vmem:[#allocation11] sm:$0x3] %vm147, %v146
    // Predicated region
    $region34: #{tpu_custom_call.1} parent=1 // pred_check
      _
    $region35: #{tpu_custom_call.1} parent=1 // pred_check_branch
      %150 = sbr.rel (0) target = $region37
    $region36: #{tpu_custom_call.1} parent=1 // pred_region
      %152 = vsyncadd [#allocation5], 0
      %s153 = sshll.u32 [#allocation8], 4
      %s154 = int_to_ptr.vmem [resolvable:$true] %s153
      %s155 = sshll.u32 %s5, 4
      %s156 = int_to_ptr.hbm [resolvable:$true] %s155
      %161 = dma.vmem_to_hbm [thread:$0]  %s154, 256, %s156, [#allocation5], 128, 128, 8
    $region37: #{tpu_custom_call.1} parent=1 // pred_fallthru
      _
    // Predicated region
    $region38: #{tpu_custom_call.1} parent=1 // pred_check
      _
    $region39: #{tpu_custom_call.1} parent=1 // pred_check_branch
      %163 = sbr.rel (0) target = $region41
    $region40: #{tpu_custom_call.1} parent=1 // pred_region
      %165 = vsyncadd [#allocation10], 0
      %s167 = sshll.u32 [#allocation9], 4
      %s168 = int_to_ptr.vmem [resolvable:$true] %s167
      %s169 = sshll.u32 %s6, 4
      %s170 = int_to_ptr.hbm [resolvable:$true] %s169
      %172 = dma.vmem_to_hbm [thread:$0]  %s168, 32, %s170, [#allocation10]
    $region41: #{tpu_custom_call.1} parent=1 // pred_fallthru
      _
    // Predicated region
    $region42: #{tpu_custom_call.1} parent=1 // pred_check
      _
    $region43: #{tpu_custom_call.1} parent=1 // pred_check_branch
      %174 = sbr.rel (0) target = $region45
    $region44: #{tpu_custom_call.1} parent=1 // pred_region
      %176 = vsyncadd [#allocation10], 0
      %s178 = sshll.u32 [#allocation11], 4
      %s179 = int_to_ptr.vmem [resolvable:$true] %s178
      %s180 = sshll.u32 %s7, 4
      %s181 = int_to_ptr.hbm [resolvable:$true] %s180
      %183 = dma.vmem_to_hbm [thread:$0]  %s179, 32, %s181, [#allocation10]
    $region45: #{tpu_custom_call.1} parent=1 // pred_fallthru
      _
    // Predicated region
    $region46: #{tpu_custom_call.1} parent=1 // pred_check
      _
    $region47: #{tpu_custom_call.1} parent=1 // pred_check_branch
      %185 = sbr.rel (0) target = $region49
    $region48: #{tpu_custom_call.1} parent=1 // pred_region
      %187 = dma.done [#allocation5], 256
    $region49: #{tpu_custom_call.1} parent=1 // pred_fallthru
      _
    // Predicated region
    $region50: #{tpu_custom_call.1} parent=1 // pred_check
      _
    $region51: #{tpu_custom_call.1} parent=1 // pred_check_branch
      %189 = sbr.rel (0) target = $region53
    $region52: #{tpu_custom_call.1} parent=1 // pred_region
      %191 = dma.done [#allocation10], 32
    $region53: #{tpu_custom_call.1} parent=1 // pred_fallthru
      _
    // Predicated region
    $region54: #{tpu_custom_call.1} parent=1 // pred_check
      _
    $region55: #{tpu_custom_call.1} parent=1 // pred_check_branch
      %193 = sbr.rel (0) target = $region57
    $region56: #{tpu_custom_call.1} parent=1 // pred_region
      %195 = dma.done [#allocation10], 32
    $region57: #{tpu_custom_call.1} parent=1 // pred_fallthru
      _
    %196 = vsyncpa [#allocation4], 1
    %197 = vsyncpa [#allocation7], 1
    %198 = vsyncpa [#allocation5], 1
    %199 = vsyncpa [#allocation10], 1

</llo_original>
